<compile_context>
chip_gen: v5e
topology: v5e:2x2
jax: 0.10.0
libtpu: 0.0.40
codegen_flags: <defaults>
</compile_context>

<pallas_src>
import math

import jax
import jax.numpy as jnp
from jax.experimental import pallas as pl
from jax.experimental.pallas import tpu as pltpu


def _mlp_kernel(x_ref, w1_ref, b1_ref, w2_ref, b2_ref, o_ref):
    # x_ref: (tm_p, P*feat); weights are block-diagonal packed forms, so the
    # two matmuls compute exactly relu(x @ W1 + b1) @ W2 + b2 per original
    # row.  MXU operands take the weight dtype (bf16 by default); biases are
    # added to the f32 accumulation.  ReLU / bias adds run on the VPU, which
    # has large slack in this HBM-bound regime.
    x = x_ref[...].astype(w1_ref.dtype)
    h = jnp.dot(x, w1_ref[...], preferred_element_type=jnp.float32)
    h = jnp.maximum(h + b1_ref[...], 0.0)          # (tm_p, P*H) + (1, P*H)
    o = jnp.dot(h.astype(w2_ref.dtype), w2_ref[...],
                preferred_element_type=jnp.float32)
    o = o + b2_ref[...]                            # (tm_p, P*L) + (1, P*L)
    o_ref[...] = o.astype(o_ref.dtype)


def _round_up(x, m):
    return ((x + m - 1) // m) * m


def _lcm(a, b):
    return a * b // math.gcd(a, b)


def mlp_forward(x, w1, b1, w2, b2, *, row_tile=8192,
                mxu_dtype=jnp.bfloat16, bf16_io=False):
    """x: (batch, ..., feat) -> (batch, ..., latent).

    Eval-mode MLP: out = relu(x @ W1 + b1) @ W2 + b2 (Dropout = identity).
    Weights are (in, out) = W_pytorch.T so the kernel uses x @ W.

    mxu_dtype: dtype of the matmul operands (accumulation is always f32).
    bf16_io:   store activations (input tile + output) as bf16 in HBM.
    """
    feat_dim, hidden_dim = w1.shape
    latent_dim = w2.shape[1]
    assert x.shape[-1] == feat_dim
    lead_shape = x.shape[:-1]

    io_dtype = jnp.bfloat16 if bf16_io else x.dtype

    x2d = x.reshape(-1, feat_dim)
    if x2d.dtype != io_dtype:
        x2d = x2d.astype(io_dtype)           # one cast pass (wrapper-side)
    n_rows = x2d.shape[0]

    # ---- lane-dense row packing -------------------------------------------
    # Smallest P such that P*feat, P*hidden, P*latent are all multiples of
    # 128 lanes (here P = 4 -> 128 / 256 / 128 lanes).
    pack = 1
    for d in (feat_dim, hidden_dim, latent_dim):
        pack = _lcm(pack, 128 // math.gcd(128, d))

    # Block-diagonal packed weights / tiled biases (built once, outside
    # kernel).  Off-diagonal zeros contribute exact zeros to the f32
    # accumulation, so per-row numerics are unchanged.
    w1_blk = jnp.kron(jnp.eye(pack, dtype=w1.dtype), w1).astype(mxu_dtype)
    w2_blk = jnp.kron(jnp.eye(pack, dtype=w2.dtype), w2).astype(mxu_dtype)
    b1_blk = jnp.tile(b1.astype(jnp.float32), pack).reshape(1, pack * hidden_dim)
    b2_blk = jnp.tile(b2.astype(jnp.float32), pack).reshape(1, pack * latent_dim)

    # ---- choose packed-row tile; pad only to a 8*pack (32-row) multiple ----
    min_rows = 8 * pack                       # minimal sublane-aligned tile
    n_padded = _round_up(n_rows, min_rows)
    if n_padded != n_rows:
        x2d = jnp.pad(x2d, ((0, n_padded - n_rows), (0, 0)))
    n_pr = n_padded // pack                   # packed rows (multiple of 8)

    tm_p = max(8, (max(row_tile, min_rows) // pack) // 8 * 8)
    tm_p = min(tm_p, n_pr)
    # Keep >= 2 grid steps when there are >= 2 minimal tiles of work so the
    # "parallel" axis can shard across v7x's 2 TensorCores.
    if n_pr >= 16:
        tm_p = min(tm_p, _round_up(pl.cdiv(n_pr, 2), 8))

    x_packed = x2d.reshape(n_pr, pack * feat_dim)
    grid = (pl.cdiv(n_pr, tm_p),)             # ragged last block is masked

    out_packed = pl.pallas_call(
        _mlp_kernel,
        out_shape=jax.ShapeDtypeStruct((n_pr, pack * latent_dim), io_dtype),
        grid_spec=pltpu.PrefetchScalarGridSpec(
            num_scalar_prefetch=0,
            grid=grid,
            in_specs=[
                pl.BlockSpec((tm_p, pack * feat_dim), lambda i: (i, 0)),
                pl.BlockSpec((pack * feat_dim, pack * hidden_dim),
                             lambda i: (0, 0)),
                pl.BlockSpec((1, pack * hidden_dim), lambda i: (0, 0)),
                pl.BlockSpec((pack * hidden_dim, pack * latent_dim),
                             lambda i: (0, 0)),
                pl.BlockSpec((1, pack * latent_dim), lambda i: (0, 0)),
            ],
            out_specs=pl.BlockSpec((tm_p, pack * latent_dim),
                                   lambda i: (i, 0)),
        ),
        compiler_params=pltpu.CompilerParams(
            dimension_semantics=("parallel",)),
    )(x_packed, w1_blk, b1_blk, w2_blk, b2_blk)

    out2d = out_packed.reshape(n_padded, latent_dim)
    if n_padded != n_rows:
        out2d = out2d[:n_rows]
    return out2d.reshape(lead_shape + (latent_dim,))


def init_params(key, feat_dim, hidden_dim, latent_dim, dtype=jnp.float32):
    """Deterministic PyTorch-Linear-style init (uniform +/- 1/sqrt(fan_in)).

    Weights are stored as (in, out) = W_pytorch.T so the kernel uses x @ W."""
    k1, k2, k3, k4 = jax.random.split(key, 4)
    lim1 = 1.0 / (feat_dim ** 0.5)
    lim2 = 1.0 / (hidden_dim ** 0.5)
    w1 = jax.random.uniform(k1, (feat_dim, hidden_dim), dtype, -lim1, lim1)
    b1 = jax.random.uniform(k2, (hidden_dim,), dtype, -lim1, lim1)
    w2 = jax.random.uniform(k3, (hidden_dim, latent_dim), dtype, -lim2, lim2)
    b2 = jax.random.uniform(k4, (latent_dim,), dtype, -lim2, lim2)
    return w1, b1, w2, b2


if __name__ == "__main__":
    feat_dim, hidden_dim, latent_dim = 32, 64, 32

    key = jax.random.PRNGKey(0)
    kx, kp = jax.random.split(key)
    w1, b1, w2, b2 = init_params(kp, feat_dim, hidden_dim, latent_dim)

    def ref_mlp(xx):
        y = jnp.maximum(xx.reshape(-1, feat_dim) @ w1 + b1, 0.0) @ w2 + b2
        return y.reshape(xx.shape[:-1] + (latent_dim,))

    # ---- small case (single grid step, 16 rows -> padded to 32) ----------
    x = jax.random.normal(kx, (2, 8, feat_dim), dtype=jnp.float32)
    ref = ref_mlp(x)
    # Exact path: f32 MXU operands + f32 I/O -> tight tolerance.
    out = jax.block_until_ready(
        mlp_forward(x, w1, b1, w2, b2, mxu_dtype=jnp.float32))
    assert out.shape == (2, 8, latent_dim), out.shape
    assert jnp.allclose(out, ref, atol=1e-5, rtol=1e-5)
    # Default path: bf16 MXU operands, f32 accumulation + f32 I/O.
    out_bf = jax.block_until_ready(mlp_forward(x, w1, b1, w2, b2))
    assert jnp.allclose(out_bf, ref, atol=5e-2, rtol=5e-2)

    # ---- larger case: multi-step grid, ragged (masked) last block, pad ----
    x_big = jax.random.normal(kx, (3, 301, feat_dim), dtype=jnp.float32)
    ref_big = ref_mlp(x_big)
    out_big = jax.block_until_ready(
        mlp_forward(x_big, w1, b1, w2, b2, mxu_dtype=jnp.float32))
    assert out_big.shape == (3, 301, latent_dim), out_big.shape
    assert jnp.allclose(out_big, ref_big, atol=1e-4, rtol=1e-4)
    out_big_bf = jax.block_until_ready(mlp_forward(x_big, w1, b1, w2, b2))
    assert jnp.allclose(out_big_bf, ref_big, atol=5e-2, rtol=5e-2)

    # ---- bf16 HBM I/O path (halves HBM bytes; looser tolerance) ----------
    out_io = jax.block_until_ready(
        mlp_forward(x_big, w1, b1, w2, b2, bf16_io=True))
    assert out_io.dtype == jnp.bfloat16
    assert jnp.allclose(out_io.astype(jnp.float32), ref_big,
                        atol=1e-1, rtol=1e-1)

    print("KERNEL_OK")
</pallas_src>

<mosaic_0001>
module attributes {stable_mosaic.version = 11 : i64} {
  func.func @_mlp_kernel(%arg0: i32, %arg1: memref<8x128xf32, #tpu.memory_space<vmem>>, %arg2: memref<128x256xf32, #tpu.memory_space<vmem>>, %arg3: memref<1x256xf32, #tpu.memory_space<vmem>>, %arg4: memref<256x128xf32, #tpu.memory_space<vmem>>, %arg5: memref<1x128xf32, #tpu.memory_space<vmem>>, %arg6: memref<8x128xf32, #tpu.memory_space<vmem>>) attributes {dimension_semantics = [#tpu.dimension_semantics<parallel>], iteration_bounds = array<i64: 1>, scalar_prefetch = 0 : i64, scratch_operands = 0 : i64, tpu.core_type = #tpu.core_type<tc>, window_params = [{transform_indices = @transform_0, window_bounds = array<i64: 8, 128>}, {pipeline_mode = #tpu.pipeline_mode<synchronous>, transform_indices = @transform_1, window_bounds = array<i64: 128, 256>}, {pipeline_mode = #tpu.pipeline_mode<synchronous>, transform_indices = @transform_2, window_bounds = array<i64: 1, 256>}, {pipeline_mode = #tpu.pipeline_mode<synchronous>, transform_indices = @transform_3, window_bounds = array<i64: 256, 128>}, {pipeline_mode = #tpu.pipeline_mode<synchronous>, transform_indices = @transform_4, window_bounds = array<i64: 1, 128>}, {transform_indices = @transform_5, window_bounds = array<i64: 8, 128>}]} {
    %c0 = arith.constant 0 : index
    %c0_0 = arith.constant 0 : index
    %0 = vector.load %arg1[%c0, %c0_0] : memref<8x128xf32, #tpu.memory_space<vmem>>, vector<8x128xf32>
    %c0_1 = arith.constant 0 : index
    %c0_2 = arith.constant 0 : index
    %1 = vector.load %arg2[%c0_1, %c0_2] : memref<128x256xf32, #tpu.memory_space<vmem>>, vector<128x256xf32>
    %cst = arith.constant dense<0.000000e+00> : vector<8x256xf32>
    %2 = tpu.matmul %0, %1, %cst {dimension_numbers = #tpu.dot_dimension_numbers<[1], [0], [0], [1], [0, 0, 1, 1], [], []>} : vector<8x128xf32>, vector<128x256xf32>, vector<8x256xf32> -> vector<8x256xf32>
    %c0_3 = arith.constant 0 : index
    %c0_4 = arith.constant 0 : index
    %3 = vector.load %arg3[%c0_3, %c0_4] : memref<1x256xf32, #tpu.memory_space<vmem>>, vector<1x256xf32>
    %4 = vector.broadcast %3 : vector<1x256xf32> to vector<8x256xf32>
    %5 = arith.addf %2, %4 : vector<8x256xf32>
    %cst_5 = arith.constant 0.000000e+00 : f32
    %6 = vector.broadcast %cst_5 : f32 to vector<8x256xf32>
    %7 = arith.maximumf %5, %6 : vector<8x256xf32>
    %c0_6 = arith.constant 0 : index
    %c0_7 = arith.constant 0 : index
    %8 = vector.load %arg4[%c0_6, %c0_7] : memref<256x128xf32, #tpu.memory_space<vmem>>, vector<256x128xf32>
    %cst_8 = arith.constant dense<0.000000e+00> : vector<8x128xf32>
    %9 = tpu.matmul %7, %8, %cst_8 {dimension_numbers = #tpu.dot_dimension_numbers<[1], [0], [0], [1], [0, 0, 1, 1], [], []>} : vector<8x256xf32>, vector<256x128xf32>, vector<8x128xf32> -> vector<8x128xf32>
    %c0_9 = arith.constant 0 : index
    %c0_10 = arith.constant 0 : index
    %10 = vector.load %arg5[%c0_9, %c0_10] : memref<1x128xf32, #tpu.memory_space<vmem>>, vector<1x128xf32>
    %11 = vector.broadcast %10 : vector<1x128xf32> to vector<8x128xf32>
    %12 = arith.addf %9, %11 : vector<8x128xf32>
    %c0_11 = arith.constant 0 : index
    %c0_12 = arith.constant 0 : index
    %13 = vector.load %arg6[%c0_11, %c0_12] : memref<8x128xf32, #tpu.memory_space<vmem>>, vector<8x128xf32>
    tpu.vector_store %arg6[%c0_11, %c0_12], %12 {strides = array<i32>} : memref<8x128xf32, #tpu.memory_space<vmem>>, vector<8x128xf32>,
    return
  }
  func.func @transform_0(%arg0: i32) -> (i32, i32) {
    %c0_i32 = arith.constant 0 : i32
    %c0_i32_0 = arith.constant 0 : i32
    return %arg0, %c0_i32 : i32, i32
  }
  func.func @transform_1(%arg0: i32) -> (i32, i32) {
    %c0_i32 = arith.constant 0 : i32
    %c0_i32_0 = arith.constant 0 : i32
    %c0_i32_1 = arith.constant 0 : i32
    return %c0_i32, %c0_i32_0 : i32, i32
  }
  func.func @transform_2(%arg0: i32) -> (i32, i32) {
    %c0_i32 = arith.constant 0 : i32
    %c0_i32_0 = arith.constant 0 : i32
    %c0_i32_1 = arith.constant 0 : i32
    return %c0_i32, %c0_i32_0 : i32, i32
  }
  func.func @transform_3(%arg0: i32) -> (i32, i32) {
    %c0_i32 = arith.constant 0 : i32
    %c0_i32_0 = arith.constant 0 : i32
    %c0_i32_1 = arith.constant 0 : i32
    return %c0_i32, %c0_i32_0 : i32, i32
  }
  func.func @transform_4(%arg0: i32) -> (i32, i32) {
    %c0_i32 = arith.constant 0 : i32
    %c0_i32_0 = arith.constant 0 : i32
    %c0_i32_1 = arith.constant 0 : i32
    return %c0_i32, %c0_i32_0 : i32, i32
  }
  func.func @transform_5(%arg0: i32) -> (i32, i32) {
    %c0_i32 = arith.constant 0 : i32
    %c0_i32_0 = arith.constant 0 : i32
    return %arg0, %c0_i32 : i32, i32
  }
}

</mosaic_0001>

<llo_original>
// kernel: tpu_custom_call.1
$region0: #{tpu_custom_call.1}
  #allocation0 [shape = 'u32[]', space=smem, size = 0x4, offset = 0x4, fixed_abs, tag = 'smem constant byte address 0x4 - core index']
  #allocation1 [shape = 'u32[72,128]{1,0:T(1,128)}', space=vmem, size = 0x9000, scoped, tag = 'internal scratch']
  %s0 = inlined_call_operand.hbm [shape: f32[8,128], index: 0, kind: input, shape index: {}]
  %s1 = inlined_call_operand.hbm [shape: f32[128,256], index: 1, kind: input, shape index: {}]
  %s2 = inlined_call_operand.hbm [shape: f32[1,256], index: 2, kind: input, shape index: {}]
  %s3 = inlined_call_operand.hbm [shape: f32[256,128], index: 3, kind: input, shape index: {}]
  %s4 = inlined_call_operand.vmem [shape: f32[1,128], index: 4, kind: input, shape index: {}]
  %s5 = inlined_call_operand.hbm [shape: f32[8,128], index: 5, kind: output, shape index: {}]
  %s6 = sld [smem:[#allocation0]]
  $region46: #{tpu_custom_call.1} parent=0
    _
  %s8 = ssub.s32 1, %s6
  %s9 = scalar_select 0, %s8, %s6
  $region1: #{tpu_custom_call.1} parent=0
    #allocation2 [shape = 'u8[4096]{0}', space=vmem, size = 0x1000, scoped, tag = 'input window, operand 0, single buffered']
    #allocation3 [shape = 's32[1]{0}', space=sflag, size = 0x4, scoped, tag = 'scoped memory for tpu_custom_call.1']
    #allocation4 [shape = 's32[1]{0}', space=sflag, size = 0x4, scoped, tag = 'scoped memory for tpu_custom_call.1']
    #allocation5 [shape = 'u8[131072]{0}', space=vmem, size = 0x20000, scoped, tag = 'input window, operand 1, single buffered']
    #allocation6 [shape = 's32[1]{0}', space=sflag, size = 0x4, scoped, tag = 'scoped memory for tpu_custom_call.1']
    #allocation7 [shape = 'u8[1024]{0}', space=vmem, size = 0x400, scoped, tag = 'input window, operand 2, single buffered']
    #allocation8 [shape = 'u8[131072]{0}', space=vmem, size = 0x20000, scoped, tag = 'input window, operand 3, single buffered']
    #allocation9 [shape = 's32[1]{0}', space=sflag, size = 0x4, scoped, tag = 'scoped memory for tpu_custom_call.1']
    #allocation10 [shape = 'u8[4096]{0}', space=vmem, size = 0x1000, scoped, tag = 'output window, operand 0, single buffered']
    %10 = vsyncpa [#allocation3], 0
    %11 = vsyncpa [#allocation6], 0
    %12 = vsyncpa [#allocation9], 0
    %13 = vsyncpa [#allocation4], 0
    // Predicated region
    $region2: #{tpu_custom_call.1} parent=1 // pred_check
      _
    $region3: #{tpu_custom_call.1} parent=1 // pred_check_branch
      %15 = sbr.rel (0) target = $region5
    $region4: #{tpu_custom_call.1} parent=1 // pred_region
      %17 = vsyncadd [#allocation3], 0
      %s19 = sshll.u32 %s0, 4
      %s20 = int_to_ptr.hbm [resolvable:$true] %s19
      %s21 = sshll.u32 [#allocation2], 4
      %s22 = int_to_ptr.vmem [resolvable:$true] %s21
      %24 = dma.hbm_to_vmem [thread:$0]  %s20, 128, %s22, [#allocation3]
    $region5: #{tpu_custom_call.1} parent=1 // pred_fallthru
      _
    // Predicated region
    $region6: #{tpu_custom_call.1} parent=1 // pred_check
      _
    $region7: #{tpu_custom_call.1} parent=1 // pred_check_branch
      %26 = sbr.rel (0) target = $region9
    $region8: #{tpu_custom_call.1} parent=1 // pred_region
      %28 = vsyncadd [#allocation6], 0
      %s29 = sshll.u32 %s1, 4
      %s30 = int_to_ptr.hbm [resolvable:$true] %s29
      %s31 = sshll.u32 [#allocation5], 4
      %s32 = int_to_ptr.vmem [resolvable:$true] %s31
      %37 = dma.hbm_to_vmem [thread:$0]  %s30, 4096, %s32, [#allocation6], 256, 256, 16
    $region9: #{tpu_custom_call.1} parent=1 // pred_fallthru
      _
    // Predicated region
    $region10: #{tpu_custom_call.1} parent=1 // pred_check
      _
    $region11: #{tpu_custom_call.1} parent=1 // pred_check_branch
      %39 = sbr.rel (0) target = $region13
    $region12: #{tpu_custom_call.1} parent=1 // pred_region
      %41 = vsyncadd [#allocation6], 0
      %s43 = sshll.u32 %s2, 4
      %s44 = int_to_ptr.hbm [resolvable:$true] %s43
      %s45 = sshll.u32 [#allocation7], 4
      %s46 = int_to_ptr.vmem [resolvable:$true] %s45
      %48 = dma.hbm_to_vmem [thread:$0]  %s44, 32, %s46, [#allocation6]
    $region13: #{tpu_custom_call.1} parent=1 // pred_fallthru
      _
    // Predicated region
    $region14: #{tpu_custom_call.1} parent=1 // pred_check
      _
    $region15: #{tpu_custom_call.1} parent=1 // pred_check_branch
      %50 = sbr.rel (0) target = $region17
    $region16: #{tpu_custom_call.1} parent=1 // pred_region
      %52 = vsyncadd [#allocation9], 0
      %s53 = sshll.u32 %s3, 4
      %s54 = int_to_ptr.hbm [resolvable:$true] %s53
      %s55 = sshll.u32 [#allocation8], 4
      %s56 = int_to_ptr.vmem [resolvable:$true] %s55
      %61 = dma.hbm_to_vmem [thread:$0]  %s54, 4096, %s56, [#allocation9], 128, 128, 8
    $region17: #{tpu_custom_call.1} parent=1 // pred_fallthru
      _
    // Predicated region
    $region18: #{tpu_custom_call.1} parent=1 // pred_check
      _
    $region19: #{tpu_custom_call.1} parent=1 // pred_check_branch
      %63 = sbr.rel (0) target = $region21
    $region20: #{tpu_custom_call.1} parent=1 // pred_region
      _
    $region21: #{tpu_custom_call.1} parent=1 // pred_fallthru
      _
    // Predicated region
    $region22: #{tpu_custom_call.1} parent=1 // pred_check
      _
    $region23: #{tpu_custom_call.1} parent=1 // pred_check_branch
      %65 = sbr.rel (0) target = $region25
    $region24: #{tpu_custom_call.1} parent=1 // pred_region
      %67 = dma.done [#allocation3], 128
    $region25: #{tpu_custom_call.1} parent=1 // pred_fallthru
      _
    // Predicated region
    $region26: #{tpu_custom_call.1} parent=1 // pred_check
      _
    $region27: #{tpu_custom_call.1} parent=1 // pred_check_branch
      %69 = sbr.rel (0) target = $region29
    $region28: #{tpu_custom_call.1} parent=1 // pred_region
      %71 = dma.done [#allocation6], 4096
    $region29: #{tpu_custom_call.1} parent=1 // pred_fallthru
      _
    // Predicated region
    $region30: #{tpu_custom_call.1} parent=1 // pred_check
      _
    $region31: #{tpu_custom_call.1} parent=1 // pred_check_branch
      %73 = sbr.rel (0) target = $region33
    $region32: #{tpu_custom_call.1} parent=1 // pred_region
      %75 = dma.done [#allocation6], 32
    $region33: #{tpu_custom_call.1} parent=1 // pred_fallthru
      _
    // Predicated region
    $region34: #{tpu_custom_call.1} parent=1 // pred_check
      _
    $region35: #{tpu_custom_call.1} parent=1 // pred_check_branch
      %77 = sbr.rel (0) target = $region37
    $region36: #{tpu_custom_call.1} parent=1 // pred_region
      %79 = dma.done [#allocation9], 4096
    $region37: #{tpu_custom_call.1} parent=1 // pred_fallthru
      _
    %v80 = vld [vmem:[#allocation2] sm:$0xff]
    %v81 = vld [vmem:[#allocation5] sm:$0xff]
    %v82 = vld [vmem:[#allocation5 + $0x8] sm:$0xff]
    %v83 = vld [vmem:[#allocation5 + $0x10] sm:$0xff]
    %v84 = vld [vmem:[#allocation5 + $0x18] sm:$0xff]
    %v85 = vld [vmem:[#allocation5 + $0x20] sm:$0xff]
    %v86 = vld [vmem:[#allocation5 + $0x28] sm:$0xff]
    %v87 = vld [vmem:[#allocation5 + $0x30] sm:$0xff]
    %v88 = vld [vmem:[#allocation5 + $0x38] sm:$0xff]
    %v89 = vld [vmem:[#allocation5 + $0x40] sm:$0xff]
    %v90 = vld [vmem:[#allocation5 + $0x48] sm:$0xff]
    %v91 = vld [vmem:[#allocation5 + $0x50] sm:$0xff]
    %v92 = vld [vmem:[#allocation5 + $0x58] sm:$0xff]
    %v93 = vld [vmem:[#allocation5 + $0x60] sm:$0xff]
    %v94 = vld [vmem:[#allocation5 + $0x68] sm:$0xff]
    %v95 = vld [vmem:[#allocation5 + $0x70] sm:$0xff]
    %v96 = vld [vmem:[#allocation5 + $0x78] sm:$0xff]
    %v97 = vld [vmem:[#allocation5 + $0x80] sm:$0xff]
    %v98 = vld [vmem:[#allocation5 + $0x88] sm:$0xff]
    %v99 = vld [vmem:[#allocation5 + $0x90] sm:$0xff]
    %v100 = vld [vmem:[#allocation5 + $0x98] sm:$0xff]
    %v101 = vld [vmem:[#allocation5 + $0xa0] sm:$0xff]
    %v102 = vld [vmem:[#allocation5 + $0xa8] sm:$0xff]
    %v103 = vld [vmem:[#allocation5 + $0xb0] sm:$0xff]
    %v104 = vld [vmem:[#allocation5 + $0xb8] sm:$0xff]
    %v105 = vld [vmem:[#allocation5 + $0xc0] sm:$0xff]
    %v106 = vld [vmem:[#allocation5 + $0xc8] sm:$0xff]
    %v107 = vld [vmem:[#allocation5 + $0xd0] sm:$0xff]
    %v108 = vld [vmem:[#allocation5 + $0xd8] sm:$0xff]
    %v109 = vld [vmem:[#allocation5 + $0xe0] sm:$0xff]
    %v110 = vld [vmem:[#allocation5 + $0xe8] sm:$0xff]
    %v111 = vld [vmem:[#allocation5 + $0xf0] sm:$0xff]
    %v112 = vld [vmem:[#allocation5 + $0xf8] sm:$0xff]
    %v113 = vld [vmem:[#allocation7] sm:$0x3]
    %v115 = vperm.slane %v113, 0
    %v116 = vperm.slane %v113, 1
    %119 = vmatpush.msra.mxu0 %v111
    %120 = vmatpush.msra.mxu0 %v109
    %121 = vmatpush.msra.mxu0 %v107
    %122 = vmatpush.msra.mxu0 %v105
    %123 = vmatpush.msra.mxu0 %v103
    %124 = vmatpush.msra.mxu0 %v101
    %125 = vmatpush.msra.mxu0 %v99
    %126 = vmatpush.msra.mxu0 %v97
    %127 = vmatpush.msra.mxu0 %v95
    %128 = vmatpush.msra.mxu0 %v93
    %129 = vmatpush.msra.mxu0 %v91
    %130 = vmatpush.msra.mxu0 %v89
    %131 = vmatpush.msra.mxu0 %v87
    %132 = vmatpush.msra.mxu0 %v85
    %133 = vmatpush.msra.mxu0 %v83
    %134 = vmatpush.msra.mxu0 %v81
    %135 = vmatmul.f32.gmra.mxu0 %v80
    %v136 = vpop.f32.mrf.mxu0
    %v137 = vadd.f32 %v115, %v136
    %138 = vdwg.mxu0
    %139 = vmatpush.msra.mxu0 %v112
    %140 = vmatpush.msra.mxu0 %v110
    %141 = vmatpush.msra.mxu0 %v108
    %142 = vmatpush.msra.mxu0 %v106
    %143 = vmatpush.msra.mxu0 %v104
    %144 = vmatpush.msra.mxu0 %v102
    %145 = vmatpush.msra.mxu0 %v100
    %146 = vmatpush.msra.mxu0 %v98
    %147 = vmatpush.msra.mxu0 %v96
    %148 = vmatpush.msra.mxu0 %v94
    %149 = vmatpush.msra.mxu0 %v92
    %150 = vmatpush.msra.mxu0 %v90
    %151 = vmatpush.msra.mxu0 %v88
    %152 = vmatpush.msra.mxu0 %v86
    %153 = vmatpush.msra.mxu0 %v84
    %154 = vmatpush.msra.mxu0 %v82
    %155 = vmatmul.f32.gmra.mxu0 %v80
    %v156 = vpop.f32.mrf.mxu0
    %v157 = vadd.f32 %v116, %v156
    %158 = vdwg.mxu0
    %v159 = vmax.f32 %v137, 0.0
    %v160 = vmax.f32 %v157, 0.0
    %v161 = vld [vmem:[#allocation8] sm:$0xff]
    %v162 = vld [vmem:[#allocation8 + $0x8] sm:$0xff]
    %v163 = vld [vmem:[#allocation8 + $0x10] sm:$0xff]
    %v164 = vld [vmem:[#allocation8 + $0x18] sm:$0xff]
    %v165 = vld [vmem:[#allocation8 + $0x20] sm:$0xff]
    %v166 = vld [vmem:[#allocation8 + $0x28] sm:$0xff]
    %v167 = vld [vmem:[#allocation8 + $0x30] sm:$0xff]
    %v168 = vld [vmem:[#allocation8 + $0x38] sm:$0xff]
    %v169 = vld [vmem:[#allocation8 + $0x40] sm:$0xff]
    %v170 = vld [vmem:[#allocation8 + $0x48] sm:$0xff]
    %v171 = vld [vmem:[#allocation8 + $0x50] sm:$0xff]
    %v172 = vld [vmem:[#allocation8 + $0x58] sm:$0xff]
    %v173 = vld [vmem:[#allocation8 + $0x60] sm:$0xff]
    %v174 = vld [vmem:[#allocation8 + $0x68] sm:$0xff]
    %v175 = vld [vmem:[#allocation8 + $0x70] sm:$0xff]
    %v176 = vld [vmem:[#allocation8 + $0x78] sm:$0xff]
    %v177 = vld [vmem:[#allocation8 + $0x80] sm:$0xff]
    %v178 = vld [vmem:[#allocation8 + $0x88] sm:$0xff]
    %v179 = vld [vmem:[#allocation8 + $0x90] sm:$0xff]
    %v180 = vld [vmem:[#allocation8 + $0x98] sm:$0xff]
    %v181 = vld [vmem:[#allocation8 + $0xa0] sm:$0xff]
    %v182 = vld [vmem:[#allocation8 + $0xa8] sm:$0xff]
    %v183 = vld [vmem:[#allocation8 + $0xb0] sm:$0xff]
    %v184 = vld [vmem:[#allocation8 + $0xb8] sm:$0xff]
    %v185 = vld [vmem:[#allocation8 + $0xc0] sm:$0xff]
    %v186 = vld [vmem:[#allocation8 + $0xc8] sm:$0xff]
    %v187 = vld [vmem:[#allocation8 + $0xd0] sm:$0xff]
    %v188 = vld [vmem:[#allocation8 + $0xd8] sm:$0xff]
    %v189 = vld [vmem:[#allocation8 + $0xe0] sm:$0xff]
    %v190 = vld [vmem:[#allocation8 + $0xe8] sm:$0xff]
    %v191 = vld [vmem:[#allocation8 + $0xf0] sm:$0xff]
    %v192 = vld [vmem:[#allocation8 + $0xf8] sm:$0xff]
    %v193 = vld [vmem:[%s4] sm:$0x1]
    %v195 = vperm.slane %v193, 0
    %197 = vmatpush.msra.mxu0 %v176
    %198 = vmatpush.msra.mxu0 %v175
    %199 = vmatpush.msra.mxu0 %v174
    %200 = vmatpush.msra.mxu0 %v173
    %201 = vmatpush.msra.mxu0 %v172
    %202 = vmatpush.msra.mxu0 %v171
    %203 = vmatpush.msra.mxu0 %v170
    %204 = vmatpush.msra.mxu0 %v169
    %205 = vmatpush.msra.mxu0 %v168
    %206 = vmatpush.msra.mxu0 %v167
    %207 = vmatpush.msra.mxu0 %v166
    %208 = vmatpush.msra.mxu0 %v165
    %209 = vmatpush.msra.mxu0 %v164
    %210 = vmatpush.msra.mxu0 %v163
    %211 = vmatpush.msra.mxu0 %v162
    %212 = vmatpush.msra.mxu0 %v161
    %213 = vmatmul.f32.gmra.mxu0 %v159
    %v214 = vpop.f32.mrf.mxu0
    %v215 = vadd.f32 %v195, %v214
    %216 = vdwg.mxu0
    %217 = vmatpush.msra.mxu0 %v192
    %218 = vmatpush.msra.mxu0 %v191
    %219 = vmatpush.msra.mxu0 %v190
    %220 = vmatpush.msra.mxu0 %v189
    %221 = vmatpush.msra.mxu0 %v188
    %222 = vmatpush.msra.mxu0 %v187
    %223 = vmatpush.msra.mxu0 %v186
    %224 = vmatpush.msra.mxu0 %v185
    %225 = vmatpush.msra.mxu0 %v184
    %226 = vmatpush.msra.mxu0 %v183
    %227 = vmatpush.msra.mxu0 %v182
    %228 = vmatpush.msra.mxu0 %v181
    %229 = vmatpush.msra.mxu0 %v180
    %230 = vmatpush.msra.mxu0 %v179
    %231 = vmatpush.msra.mxu0 %v178
    %232 = vmatpush.msra.mxu0 %v177
    %233 = vmatmul.f32.gmra.mxu0 %v160
    %v234 = vpop.f32.mrf.mxu0
    %v235 = vadd.f32 %v215, %v234
    %236 = vdwg.mxu0
    %237 = vst [vmem:[#allocation10] sm:$0xff] %v235
    // Predicated region
    $region38: #{tpu_custom_call.1} parent=1 // pred_check
      _
    $region39: #{tpu_custom_call.1} parent=1 // pred_check_branch
      %239 = sbr.rel (0) target = $region41
    $region40: #{tpu_custom_call.1} parent=1 // pred_region
      %241 = vsyncadd [#allocation4], 0
      %s243 = sshll.u32 [#allocation10], 4
      %s244 = int_to_ptr.vmem [resolvable:$true] %s243
      %s245 = sshll.u32 %s5, 4
      %s246 = int_to_ptr.hbm [resolvable:$true] %s245
      %248 = dma.vmem_to_hbm [thread:$0]  %s244, 128, %s246, [#allocation4]
    $region41: #{tpu_custom_call.1} parent=1 // pred_fallthru
      _
    // Predicated region
    $region42: #{tpu_custom_call.1} parent=1 // pred_check
      _
    $region43: #{tpu_custom_call.1} parent=1 // pred_check_branch
      %250 = sbr.rel (0) target = $region45
    $region44: #{tpu_custom_call.1} parent=1 // pred_region
      %252 = dma.done [#allocation4], 128
    $region45: #{tpu_custom_call.1} parent=1 // pred_fallthru
      _
    %253 = vsyncpa [#allocation3], 1
    %254 = vsyncpa [#allocation6], 1
    %255 = vsyncpa [#allocation9], 1
    %256 = vsyncpa [#allocation4], 1

</llo_original>
